<compile_context>
chip_gen: v5e
topology: v5e:2x2
jax: 0.10.0
libtpu: 0.0.40
codegen_flags: <defaults>
</compile_context>

<pallas_src>
import functools

import jax
import jax.numpy as jnp
from jax.experimental import pallas as pl
from jax.experimental.pallas import tpu as pltpu

_LANE = 128
_SUB = 8


def _round_up(a, b):
    return (a + b - 1) // b * b


def _yolo_iou_kernel(t_ref, x_ref, bbox_ref, tmax_ref):
    # t_ref   : (8,) SMEM f32            -> (cx, cy, w, h, cls, pad, pad, pad)
    # x_ref   : (4, TILE_R, 128) VMEM f32   rows = cx, cy, w, h (lane-dense boxes)
    # bbox_ref: (TILE_R, 128) VMEM f32      per-box IoU
    # tmax_ref: (8, 128) VMEM f32           this tile's max IoU (broadcast slab)
    cx = x_ref[0]
    cy = x_ref[1]
    w = x_ref[2]
    h = x_ref[3]

    # utils.center2xyxy(x): predicted box corners
    bx1 = cx - w * 0.5
    by1 = cy - h * 0.5
    bx2 = cx + w * 0.5
    by2 = cy + h * 0.5

    # utils.center2xyxy(targets): single target box corners (scalars from SMEM)
    tcx = t_ref[0]
    tcy = t_ref[1]
    tw = t_ref[2]
    th = t_ref[3]
    tx1 = tcx - tw * 0.5
    ty1 = tcy - th * 0.5
    tx2 = tcx + tw * 0.5
    ty2 = tcy + th * 0.5

    # utils.bb_iou(target_corners, input_corners[..., :4])
    iw = jnp.maximum(jnp.minimum(bx2, tx2) - jnp.maximum(bx1, tx1), 0.0)
    ih = jnp.maximum(jnp.minimum(by2, ty2) - jnp.maximum(by1, ty1), 0.0)
    inter = iw * ih
    area_b = (bx2 - bx1) * (by2 - by1)
    area_t = (tx2 - tx1) * (ty2 - ty1)
    union = area_b + area_t - inter + 1e-16
    iou = inter * pl.reciprocal(union, approx=False)

    bbox_ref[...] = iou
    # per-tile max, broadcast into an aligned (8,128) slab -> unmasked store
    tmax_ref[...] = jnp.broadcast_to(jnp.max(iou, keepdims=True), tmax_ref.shape)


@functools.partial(jax.jit, static_argnames=("max_tile_lanes",))
def yolo_loss_forward(x, targets, *, max_tile_lanes=8192):
    """Live portion of YoloLoss.forward (everything before sys.exit(0)).

    x       : (N, 5 + num_classes) predictions; only columns 0..3 (cx,cy,w,h)
              participate in the live forward path.
    targets : (5,) single ground-truth box (cx, cy, w, h, class).
    Returns (bbox, obj_conf, obj_mask, noobj_mask).
    """
    N = x.shape[0]

    # --- tiling over the box axis -------------------------------------------
    n_min = _round_up(N, _LANE)
    if n_min <= max_tile_lanes:
        tile_lanes = n_min                    # single tile: block == full array
        n_pad = n_min
    else:
        tile_lanes = _round_up(max_tile_lanes, _SUB * _LANE)   # (8,128)-aligned
        n_pad = _round_up(N, tile_lanes)
    rows = n_pad // _LANE
    tile_r = tile_lanes // _LANE
    grid = rows // tile_r

    # Only transpose / DMA the 4 coordinate columns — never the class logits.
    coords = x[:, :4].astype(jnp.float32)
    if n_pad != N:
        # Zero-padded boxes have IoU 0 (never above the real max >= 0) and are
        # sliced off before the mask compare below.
        coords = jnp.pad(coords, ((0, n_pad - N), (0, 0)))
    coords_t = coords.T.reshape(4, rows, _LANE)        # (4, R, 128) lane-dense

    t = jnp.zeros((8,), jnp.float32).at[: targets.shape[0]].set(
        targets.astype(jnp.float32)
    )

    bbox, tile_max = pl.pallas_call(
        _yolo_iou_kernel,
        grid=(grid,),
        in_specs=[
            pl.BlockSpec(memory_space=pltpu.MemorySpace.SMEM),        # targets
            pl.BlockSpec((4, tile_r, _LANE), lambda i: (0, i, 0)),    # coords
        ],
        out_specs=(
            pl.BlockSpec((tile_r, _LANE), lambda i: (i, 0)),          # IoU
            pl.BlockSpec((_SUB, _LANE), lambda i: (i, 0)),            # tile max
        ),
        out_shape=(
            jax.ShapeDtypeStruct((rows, _LANE), jnp.float32),
            jax.ShapeDtypeStruct((grid * _SUB, _LANE), jnp.float32),
        ),
        compiler_params=pltpu.CompilerParams(
            dimension_semantics=("parallel",),
        ),
    )(t, coords_t)

    bbox = bbox.reshape(n_pad)[:N]                       # per-box IoU
    obj_conf = jnp.max(tile_max).reshape(1)              # bbox.max().unsqueeze(0)
    obj_mask = (bbox == obj_conf).astype(jnp.uint8)      # torch.ByteTensor
    noobj_mask = jnp.bitwise_xor(obj_mask, jnp.uint8(1))  # obj_mask ^ 1

    # TODO(synk): the original forward calls sys.exit(0) here; the MSE/BCE/CE
    # loss terms, the x[obj_mask] boolean gathers (data-dependent shapes),
    # transform_detections and the cv2 rectangle/imshow are dead code and are
    # not implemented.
    return bbox, obj_conf, obj_mask, noobj_mask


def _iou_reference(x, t):
    bx1 = x[:, 0] - x[:, 2] * 0.5
    by1 = x[:, 1] - x[:, 3] * 0.5
    bx2 = x[:, 0] + x[:, 2] * 0.5
    by2 = x[:, 1] + x[:, 3] * 0.5
    tx1 = t[0] - t[2] * 0.5
    ty1 = t[1] - t[3] * 0.5
    tx2 = t[0] + t[2] * 0.5
    ty2 = t[1] + t[3] * 0.5
    iw = jnp.maximum(jnp.minimum(bx2, tx2) - jnp.maximum(bx1, tx1), 0.0)
    ih = jnp.maximum(jnp.minimum(by2, ty2) - jnp.maximum(by1, ty1), 0.0)
    inter = iw * ih
    union = (bx2 - bx1) * (by2 - by1) + (tx2 - tx1) * (ty2 - ty1) - inter + 1e-16
    return inter / union


if __name__ == "__main__":
    key = jax.random.PRNGKey(0)
    kx, _ = jax.random.split(key)

    N, num_classes = 128, 4
    F = 5 + num_classes                           # (cx, cy, w, h, conf, cls...)

    x = jax.random.uniform(kx, (N, F), jnp.float32, minval=0.0, maxval=1.0)
    x = x.at[:, 0:2].set(x[:, 0:2] * 416.0)       # box centers (pixels)
    x = x.at[:, 2:4].set(10.0 + x[:, 2:4] * 100.0)  # box widths / heights

    # single ground-truth box: (cx, cy, w, h, class)
    targets = jnp.array([200.0, 150.0, 60.0, 80.0, 2.0], jnp.float32)

    bbox, obj_conf, obj_mask, noobj_mask = jax.block_until_ready(
        yolo_loss_forward(x, targets)
    )

    # correctness check against a pure-JAX reference
    iou_ref = _iou_reference(x, targets)
    assert jnp.allclose(bbox, iou_ref, rtol=1e-5, atol=1e-6)
    assert jnp.allclose(obj_conf[0], iou_ref.max(), rtol=1e-5, atol=1e-6)
    assert int(obj_mask.sum()) >= 1
    assert bool(
        jnp.all((obj_mask.astype(jnp.int32) + noobj_mask.astype(jnp.int32)) == 1)
    )

    print("KERNEL_OK")
</pallas_src>

<mosaic_0001>
module attributes {stable_mosaic.version = 11 : i64} {
  func.func @_yolo_iou_kernel(%arg0: i32, %arg1: memref<8xf32, #tpu.memory_space<smem>>, %arg2: memref<4x1x128xf32, #tpu.memory_space<vmem>>, %arg3: memref<1x128xf32, #tpu.memory_space<vmem>>, %arg4: memref<8x128xf32, #tpu.memory_space<vmem>>) attributes {dimension_semantics = [#tpu.dimension_semantics<parallel>], iteration_bounds = array<i64: 1>, scalar_prefetch = 0 : i64, scratch_operands = 0 : i64, tpu.core_type = #tpu.core_type<tc>, window_params = [{transform_indices = @transform_0, window_bounds = array<i64: 8>}, {transform_indices = @transform_1, window_bounds = array<i64: 4, 1, 128>}, {transform_indices = @transform_2, window_bounds = array<i64: 1, 128>}, {transform_indices = @transform_3, window_bounds = array<i64: 8, 128>}]} {
    %c0 = arith.constant 0 : index
    %c0_0 = arith.constant 0 : index
    %c0_1 = arith.constant 0 : index
    %0 = vector.load %arg2[%c0, %c0_0, %c0_1] : memref<4x1x128xf32, #tpu.memory_space<vmem>>, vector<1x1x128xf32>
    %1 = vector.shape_cast %0 : vector<1x1x128xf32> to vector<1x128xf32>
    %c1 = arith.constant 1 : index
    %c0_2 = arith.constant 0 : index
    %c0_3 = arith.constant 0 : index
    %2 = vector.load %arg2[%c1, %c0_2, %c0_3] : memref<4x1x128xf32, #tpu.memory_space<vmem>>, vector<1x1x128xf32>
    %3 = vector.shape_cast %2 : vector<1x1x128xf32> to vector<1x128xf32>
    %c2 = arith.constant 2 : index
    %c0_4 = arith.constant 0 : index
    %c0_5 = arith.constant 0 : index
    %4 = vector.load %arg2[%c2, %c0_4, %c0_5] : memref<4x1x128xf32, #tpu.memory_space<vmem>>, vector<1x1x128xf32>
    %5 = vector.shape_cast %4 : vector<1x1x128xf32> to vector<1x128xf32>
    %c3 = arith.constant 3 : index
    %c0_6 = arith.constant 0 : index
    %c0_7 = arith.constant 0 : index
    %6 = vector.load %arg2[%c3, %c0_6, %c0_7] : memref<4x1x128xf32, #tpu.memory_space<vmem>>, vector<1x1x128xf32>
    %7 = vector.shape_cast %6 : vector<1x1x128xf32> to vector<1x128xf32>
    %cst = arith.constant 5.000000e-01 : f32
    %8 = vector.broadcast %cst : f32 to vector<1x128xf32>
    %9 = arith.mulf %5, %8 : vector<1x128xf32>
    %10 = arith.subf %1, %9 : vector<1x128xf32>
    %cst_8 = arith.constant 5.000000e-01 : f32
    %11 = vector.broadcast %cst_8 : f32 to vector<1x128xf32>
    %12 = arith.mulf %7, %11 : vector<1x128xf32>
    %13 = arith.subf %3, %12 : vector<1x128xf32>
    %cst_9 = arith.constant 5.000000e-01 : f32
    %14 = vector.broadcast %cst_9 : f32 to vector<1x128xf32>
    %15 = arith.mulf %5, %14 : vector<1x128xf32>
    %16 = arith.addf %1, %15 : vector<1x128xf32>
    %cst_10 = arith.constant 5.000000e-01 : f32
    %17 = vector.broadcast %cst_10 : f32 to vector<1x128xf32>
    %18 = arith.mulf %7, %17 : vector<1x128xf32>
    %19 = arith.addf %3, %18 : vector<1x128xf32>
    %c0_11 = arith.constant 0 : index
    %20 = memref.load %arg1[%c0_11] : memref<8xf32, #tpu.memory_space<smem>>
    %c1_12 = arith.constant 1 : index
    %21 = memref.load %arg1[%c1_12] : memref<8xf32, #tpu.memory_space<smem>>
    %c2_13 = arith.constant 2 : index
    %22 = memref.load %arg1[%c2_13] : memref<8xf32, #tpu.memory_space<smem>>
    %c3_14 = arith.constant 3 : index
    %23 = memref.load %arg1[%c3_14] : memref<8xf32, #tpu.memory_space<smem>>
    %cst_15 = arith.constant 5.000000e-01 : f32
    %24 = arith.mulf %22, %cst_15 : f32
    %25 = arith.subf %20, %24 : f32
    %cst_16 = arith.constant 5.000000e-01 : f32
    %26 = arith.mulf %23, %cst_16 : f32
    %27 = arith.subf %21, %26 : f32
    %cst_17 = arith.constant 5.000000e-01 : f32
    %28 = arith.mulf %22, %cst_17 : f32
    %29 = arith.addf %20, %28 : f32
    %cst_18 = arith.constant 5.000000e-01 : f32
    %30 = arith.mulf %23, %cst_18 : f32
    %31 = arith.addf %21, %30 : f32
    %32 = vector.broadcast %29 : f32 to vector<1x128xf32>
    %33 = arith.minimumf %16, %32 : vector<1x128xf32>
    %34 = vector.broadcast %25 : f32 to vector<1x128xf32>
    %35 = arith.maximumf %10, %34 : vector<1x128xf32>
    %36 = arith.subf %33, %35 : vector<1x128xf32>
    %cst_19 = arith.constant 0.000000e+00 : f32
    %37 = vector.broadcast %cst_19 : f32 to vector<1x128xf32>
    %38 = arith.maximumf %36, %37 : vector<1x128xf32>
    %39 = vector.broadcast %31 : f32 to vector<1x128xf32>
    %40 = arith.minimumf %19, %39 : vector<1x128xf32>
    %41 = vector.broadcast %27 : f32 to vector<1x128xf32>
    %42 = arith.maximumf %13, %41 : vector<1x128xf32>
    %43 = arith.subf %40, %42 : vector<1x128xf32>
    %cst_20 = arith.constant 0.000000e+00 : f32
    %44 = vector.broadcast %cst_20 : f32 to vector<1x128xf32>
    %45 = arith.maximumf %43, %44 : vector<1x128xf32>
    %46 = arith.mulf %38, %45 : vector<1x128xf32>
    %47 = arith.subf %16, %10 : vector<1x128xf32>
    %48 = arith.subf %19, %13 : vector<1x128xf32>
    %49 = arith.mulf %47, %48 : vector<1x128xf32>
    %50 = arith.subf %29, %25 : f32
    %51 = arith.subf %31, %27 : f32
    %52 = arith.mulf %50, %51 : f32
    %53 = vector.broadcast %52 : f32 to vector<1x128xf32>
    %54 = arith.addf %49, %53 : vector<1x128xf32>
    %55 = arith.subf %54, %46 : vector<1x128xf32>
    %cst_21 = arith.constant 1.000000e-16 : f32
    %56 = vector.broadcast %cst_21 : f32 to vector<1x128xf32>
    %57 = arith.addf %55, %56 : vector<1x128xf32>
    %58 = tpu.reciprocal %57 : vector<1x128xf32> -> vector<1x128xf32>
    %59 = arith.mulf %46, %58 : vector<1x128xf32>
    %c0_22 = arith.constant 0 : index
    %c0_23 = arith.constant 0 : index
    %60 = vector.load %arg3[%c0_22, %c0_23] : memref<1x128xf32, #tpu.memory_space<vmem>>, vector<1x128xf32>
    tpu.vector_store %arg3[%c0_22, %c0_23], %59 {strides = array<i32>} : memref<1x128xf32, #tpu.memory_space<vmem>>, vector<1x128xf32>,
    %61 = vector.shape_cast %59 : vector<1x128xf32> to vector<1x1x128xf32>
    %cst_24 = arith.constant dense<0xFF800000> : vector<1xf32>
    %62 = vector.multi_reduction <maximumf>, %61, %cst_24 [1, 2] : vector<1x1x128xf32> to vector<1xf32>
    %63 = vector.shape_cast %62 : vector<1xf32> to vector<1x1x1xf32>
    %64 = vector.extract %63[0, 0, 0] : f32 from vector<1x1x1xf32>
    %65 = vector.broadcast %64 : f32 to vector<1x1xf32>
    %66 = vector.shape_cast %65 : vector<1x1xf32> to vector<1x1xf32>
    %67 = vector.broadcast %66 : vector<1x1xf32> to vector<8x128xf32>
    %c0_25 = arith.constant 0 : index
    %c0_26 = arith.constant 0 : index
    %68 = vector.load %arg4[%c0_25, %c0_26] : memref<8x128xf32, #tpu.memory_space<vmem>>, vector<8x128xf32>
    tpu.vector_store %arg4[%c0_25, %c0_26], %67 {strides = array<i32>} : memref<8x128xf32, #tpu.memory_space<vmem>>, vector<8x128xf32>,
    return
  }
  func.func @transform_0(%arg0: i32) -> i32 {
    %c0_i32 = arith.constant 0 : i32
    %c0_i32_0 = arith.constant 0 : i32
    return %c0_i32 : i32
  }
  func.func @transform_1(%arg0: i32) -> (i32, i32, i32) {
    %c0_i32 = arith.constant 0 : i32
    %c0_i32_0 = arith.constant 0 : i32
    %c0_i32_1 = arith.constant 0 : i32
    return %c0_i32, %arg0, %c0_i32_0 : i32, i32, i32
  }
  func.func @transform_2(%arg0: i32) -> (i32, i32) {
    %c0_i32 = arith.constant 0 : i32
    %c0_i32_0 = arith.constant 0 : i32
    return %arg0, %c0_i32 : i32, i32
  }
  func.func @transform_3(%arg0: i32) -> (i32, i32) {
    %c0_i32 = arith.constant 0 : i32
    %c0_i32_0 = arith.constant 0 : i32
    return %arg0, %c0_i32 : i32, i32
  }
}

</mosaic_0001>

<llo_original>
// kernel: yolo_loss_forward.1
$region0: #{yolo_loss_forward.1}
  #allocation0 [shape = 'u32[]', space=smem, size = 0x4, offset = 0x4, fixed_abs, tag = 'smem constant byte address 0x4 - core index']
  #allocation1 [shape = 'u32[72,128]{1,0:T(1,128)}', space=vmem, size = 0x9000, scoped, tag = 'internal scratch']
  %s0 = inlined_call_operand.vmem [shape: f32[8], index: 0, kind: input, shape index: {}]
  %s1 = inlined_call_operand.vmem [shape: f32[4,1,128], index: 1, kind: input, shape index: {}]
  %s2 = inlined_call_operand.vmem [shape: f32[1,128], index: 2, kind: output, shape index: {0}]
  %s3 = inlined_call_operand.vmem [shape: f32[8,128], index: 3, kind: output, shape index: {1}]
  %4 = xla_tuple %s2, %s3
  %s5 = sld [smem:[#allocation0]]
  $region30: #{yolo_loss_forward.1} parent=0
    _
  %s7 = ssub.s32 1, %s5
  %s8 = scalar_select 0, %s7, %s5
  $region1: #{yolo_loss_forward.1} parent=0
    #allocation2 [shape = 'u8[512]{0}', space=smem, size = 0x200, scoped, tag = 'input window, operand 0, single buffered']
    #allocation3 [shape = 's32[1]{0}', space=sflag, size = 0x4, scoped, tag = 'scoped memory for yolo_loss_forward.1']
    %9 = vsyncpa [#allocation3], 0
    // Predicated region
    $region2: #{yolo_loss_forward.1} parent=1 // pred_check
      _
    $region3: #{yolo_loss_forward.1} parent=1 // pred_check_branch
      %11 = sbr.rel (0) target = $region5
    $region4: #{yolo_loss_forward.1} parent=1 // pred_region
      %13 = vsyncadd [#allocation3], 0
      %s15 = sshll.u32 %s0, 4
      %s16 = int_to_ptr.vmem [resolvable:$true] %s15
      %18 = dma.vmem_to_smem %s16, 16, [#allocation2], [#allocation3]
    $region5: #{yolo_loss_forward.1} parent=1 // pred_fallthru
      _
    // Predicated region
    $region6: #{yolo_loss_forward.1} parent=1 // pred_check
      _
    $region7: #{yolo_loss_forward.1} parent=1 // pred_check_branch
      %20 = sbr.rel (0) target = $region9
    $region8: #{yolo_loss_forward.1} parent=1 // pred_region
      _
    $region9: #{yolo_loss_forward.1} parent=1 // pred_fallthru
      _
    // Predicated region
    $region10: #{yolo_loss_forward.1} parent=1 // pred_check
      _
    $region11: #{yolo_loss_forward.1} parent=1 // pred_check_branch
      %22 = sbr.rel (0) target = $region13
    $region12: #{yolo_loss_forward.1} parent=1 // pred_region
      %24 = dma.done [#allocation3], 16
    $region13: #{yolo_loss_forward.1} parent=1 // pred_fallthru
      _
    %25 = sfence
    %v26 = vld [vmem:[%s1] sm:$0x1]
    %s27 = scalar_lea.vmem %s1, 1
    %v28 = vld [vmem:[%s27] sm:$0x1]
    %s29 = scalar_lea.vmem %s1, 2
    %v30 = vld [vmem:[%s29] sm:$0x1]
    %s31 = scalar_lea.vmem %s1, 3
    %v32 = vld [vmem:[%s31] sm:$0x1]
    %v33 = vmul.f32 %v30, 0.5
    %v34 = vsub.f32 %v26, %v33
    %v35 = vmul.f32 %v32, 0.5
    %v36 = vsub.f32 %v28, %v35
    %v37 = vadd.f32 %v26, %v33
    %v38 = vadd.f32 %v28, %v35
    %s39 = sld [smem:[#allocation2]]
    %s40 = sld [smem:[#allocation2 + $0x1]]
    %s41 = sld [smem:[#allocation2 + $0x2]]
    %s42 = sld [smem:[#allocation2 + $0x3]]
    %s43 = smul.f32 %s41, 0.5
    %s44 = ssub.f32 %s39, %s43
    %s45 = smul.f32 %s42, 0.5
    %s46 = ssub.f32 %s40, %s45
    %s47 = sadd.f32 %s39, %s43
    %s48 = sadd.f32 %s40, %s45
    %v49 = vstv %s47
    %v50 = vmin.f32 %v37, %v49
    %v51 = vstv %s44
    %v52 = vmax.f32 %v34, %v51
    %v53 = vsub.f32 %v50, %v52
    %v54 = vmax.f32 %v53, 0.0
    %v55 = vstv %s48
    %v56 = vmin.f32 %v38, %v55
    %v57 = vstv %s46
    %v58 = vmax.f32 %v36, %v57
    %v59 = vsub.f32 %v56, %v58
    %v60 = vmax.f32 %v59, 0.0
    %v61 = vmul.f32 %v54, %v60
    %v62 = vsub.f32 %v37, %v34
    %v63 = vsub.f32 %v38, %v36
    %v64 = vmul.f32 %v62, %v63
    %s65 = ssub.f32 %s47, %s44
    %s66 = ssub.f32 %s48, %s46
    %s67 = smul.f32 %s65, %s66
    %v68 = vstv %s67
    %v69 = vadd.f32 %v64, %v68
    %v70 = vsub.f32 %v69, %v61
    %v71 = vadd.f32 %v70, 1e-16
    %v72 = vrcp.pop %v71
    %v73 = vmul.f32 %v71, %v72
    %v74 = vsub.f32 1.0, %v73
    %v75 = vmul.f32 %v72, %v74
    %v76 = vadd.f32 %v72, %v75
    %vm77 = vweird.f32 %v71
    %vm78 = vweird.f32 %v72
    %vm79 = vmor %vm77, %vm78
    %v80 = vsel %vm79, %v72, %v76
    %v81 = vand.u32 2147483647, %v71
    %vm82 = vcmp.eq.f32.partialorder %v81, 8.507059e+37
    %v83 = vand.u32 %v71, 2147483648
    %v84 = vor.u32 1.1754944e-38, %v83
    %v85 = vsel %vm82, %v84, %v80
    %v86 = vmul.f32 %v61, %v85
    %87 = vst [vmem:[%s2] sm:$0x1] %v86
    %vm88 = vcmask 1040384
    %v89 = vsel %vm88, %v86, -inf
    %90 = vmax.xlane.f32.xlu0 %v89
    %v91 = vpop.xlane.xlu0 %90
    %v92 = vrot.slane %v91, 4
    %v93 = vmax.f32 %v91, %v92
    %v94 = vrot.slane %v93, 2
    %v95 = vmax.f32 %v93, %v94
    %v96 = vrot.slane %v95, 1
    %v97 = vmax.f32 %v95, %v96
    %s98 = vtos %v97
    %v99 = vstv %s98
    %100 = vst [vmem:[%s3] sm:$0xff] %v99
    // Predicated region
    $region14: #{yolo_loss_forward.1} parent=1 // pred_check
      _
    $region15: #{yolo_loss_forward.1} parent=1 // pred_check_branch
      %102 = sbr.rel (0) target = $region17
    $region16: #{yolo_loss_forward.1} parent=1 // pred_region
      _
    $region17: #{yolo_loss_forward.1} parent=1 // pred_fallthru
      _
    // Predicated region
    $region18: #{yolo_loss_forward.1} parent=1 // pred_check
      _
    $region19: #{yolo_loss_forward.1} parent=1 // pred_check_branch
      %104 = sbr.rel (0) target = $region21
    $region20: #{yolo_loss_forward.1} parent=1 // pred_region
      _
    $region21: #{yolo_loss_forward.1} parent=1 // pred_fallthru
      _
    // Predicated region
    $region22: #{yolo_loss_forward.1} parent=1 // pred_check
      _
    $region23: #{yolo_loss_forward.1} parent=1 // pred_check_branch
      %106 = sbr.rel (0) target = $region25
    $region24: #{yolo_loss_forward.1} parent=1 // pred_region
      _
    $region25: #{yolo_loss_forward.1} parent=1 // pred_fallthru
      _
    // Predicated region
    $region26: #{yolo_loss_forward.1} parent=1 // pred_check
      _
    $region27: #{yolo_loss_forward.1} parent=1 // pred_check_branch
      %108 = sbr.rel (0) target = $region29
    $region28: #{yolo_loss_forward.1} parent=1 // pred_region
      _
    $region29: #{yolo_loss_forward.1} parent=1 // pred_fallthru
      _
    %109 = vsyncpa [#allocation3], 1

</llo_original>
